<compile_context>
chip_gen: v6e
topology: v6e:2x2x1
jax: 0.10.0
libtpu: 0.0.40
codegen_flags: <defaults>
</compile_context>

<pallas_src>
import functools

import jax
import jax.numpy as jnp
from jax import lax
from jax.experimental import pallas as pl
from jax.experimental.pallas import tpu as pltpu


# ----------------------------- kernels --------------------------------------


def _matmul_kernel_single_k(x_ref, w_ref, o_ref):
    """Whole K in one tile: single MXU pass, no accumulation state."""
    o_ref[...] = jnp.dot(
        x_ref[...], w_ref[...], preferred_element_type=jnp.float32
    ).astype(o_ref.dtype)


def _mask_k_tail(x, w, k_rem):
    """Zero the ragged K tail of the last k block (both operands, so products of
    out-of-bounds garbage are exactly 0 and cannot inject NaN/Inf)."""
    k = pl.program_id(2)
    nk = pl.num_programs(2)
    valid = jnp.where(k == nk - 1, k_rem, x.shape[-1])
    col = lax.broadcasted_iota(jnp.int32, x.shape, 1)
    row = lax.broadcasted_iota(jnp.int32, w.shape, 0)
    x = jnp.where(col < valid, x, jnp.zeros_like(x))
    w = jnp.where(row < valid, w, jnp.zeros_like(w))
    return x, w


def _matmul_kernel_acc_in_out(x_ref, w_ref, o_ref, *, k_rem):
    """Split-K reduction, f32 output: accumulate directly into the VMEM-resident
    output block (its block index is constant across the k axis)."""
    @pl.when(pl.program_id(2) == 0)
    def _():
        o_ref[...] = jnp.zeros_like(o_ref)

    x, w = x_ref[...], w_ref[...]
    if k_rem:  # static (trace-time) flag: only emitted for ragged K
        x, w = _mask_k_tail(x, w, k_rem)
    o_ref[...] += jnp.dot(x, w, preferred_element_type=jnp.float32)


def _matmul_kernel_scratch(x_ref, w_ref, o_ref, acc_ref, *, k_rem):
    """Split-K reduction, non-f32 output: f32 scratch accumulator."""
    @pl.when(pl.program_id(2) == 0)
    def _():
        acc_ref[...] = jnp.zeros_like(acc_ref)

    x, w = x_ref[...], w_ref[...]
    if k_rem:
        x, w = _mask_k_tail(x, w, k_rem)
    acc_ref[...] += jnp.dot(x, w, preferred_element_type=jnp.float32)

    @pl.when(pl.program_id(2) == pl.num_programs(2) - 1)
    def _():
        o_ref[...] = acc_ref[...].astype(o_ref.dtype)


# ----------------------------- wrapper ---------------------------------------


def _round_up(v, m):
    return (v + m - 1) // m * m


def _round_down(v, m):
    return max(m, (v // m) * m)


def data_parallel_linear(x, w, *, tm=None, tn=None, tk=None,
                         compute_dtype=None, allow_xla_fallback=True):
    """y = x @ w via a tiled Pallas TPU matmul kernel (forward of the layer)."""
    M, K = x.shape
    K2, N = w.shape
    assert K == K2, "in_features mismatch"
    out_dtype = x.dtype

    if compute_dtype is not None:
        # Optional bf16 streaming of operands (halves HBM traffic; MXU default
        # precision already truncates f32 inputs to bf16).
        x = x.astype(compute_dtype)
        w = w.astype(compute_dtype)

    in_bytes = jnp.dtype(x.dtype).itemsize
    out_bytes = jnp.dtype(out_dtype).itemsize

    # Tiny problems: custom-call dispatch dominates wall time on every
    # generation; plain XLA dot is strictly better there.
    if allow_xla_fallback and 2 * M * N * K < (64 << 20):
        return jnp.dot(x, w, preferred_element_type=jnp.float32).astype(out_dtype)

    # ---- generation-aware VMEM budgets --------------------------------------
    try:
        vmem_cap = int(getattr(pltpu.get_tpu_info(), "vmem_capacity_bytes",
                               64 << 20))
    except Exception:  # emulation / unknown target: be conservative
        vmem_cap = 64 << 20
    if vmem_cap <= (64 << 20):       # v7x-class: 64 MiB physical per TensorCore
        vmem_budget = 40 << 20       # leave headroom for compiler scratch
        w_resident_cap = 22 << 20    # max double-buffered resident W strip
        x_tile_target = 2 << 20      # 3.2 TB/s HBM: >=2 MiB/step hides 0.35us
    else:                            # v5e / v6e: 128 MiB physical
        vmem_budget = 96 << 20
        w_resident_cap = 48 << 20
        x_tile_target = 1 << 20

    # ---- tile selection ------------------------------------------------------
    # N tile: prefer full N (data-parallel linear regime: N is modest).
    if tn is None:
        tn = N if (2 * K * N * in_bytes <= w_resident_cap or N <= 512) else 512
    tn = min(tn, N)
    if tn != N:
        tn = _round_down(tn, 128)
        if tn > N:
            tn = N

    # K tile: keep the whole reduction in one tile (no k loop, no accumulator,
    # no W re-streaming across the batch sweep) whenever the strip fits.
    if tk is None:
        if 2 * K * tn * in_bytes <= w_resident_cap:
            tk = K
        else:
            tk = w_resident_cap // (2 * tn * in_bytes)
    tk = min(tk, K)
    if tk != K:
        tk = _round_down(tk, 128)
        if tk > K:
            tk = K

    # M tile: as large as the VMEM budget allows (amortizes ~0.35us/step grid
    # bookkeeping), capped at 2048.
    if tm is None:
        per_row = 2 * (tk * in_bytes + tn * out_bytes)
        avail = max(vmem_budget - 2 * tk * tn * in_bytes, 8 << 20)
        tm = avail // per_row
        tm = max(tm, x_tile_target // max(tk * in_bytes, 1))
        tm = max(256, min(tm, 2048))
    tm = min(tm, M)
    if tm != M:
        tm = _round_down(tm, 8)
        if tm > M:
            tm = M
    # Keep >= 2 blocks on the parallel M axis when M is large so both v7x
    # TensorCores get work (one extra grid step is negligible on 1-TC chips).
    if M >= 1024 and tm >= M:
        tm = _round_up(pl.cdiv(M, 2), 8)

    # Final VMEM safety: shrink tm until the double-buffered working set fits.
    def _needed(tm_):
        acc = tm_ * tn * 4 if (tk < K and out_dtype != jnp.float32) else 0
        return (2 * (tm_ * tk + tk * tn) * in_bytes
                + 2 * tm_ * tn * out_bytes + acc)

    while tm > 8 and _needed(tm) > vmem_budget:
        tm = _round_down(tm // 2, 8)

    gm, gn, gk = pl.cdiv(M, tm), pl.cdiv(N, tn), pl.cdiv(K, tk)
    k_rem = K % tk if gk > 1 else 0

    # ---- kernel variant ------------------------------------------------------
    if gk == 1:
        kernel = _matmul_kernel_single_k
        scratch_shapes = []
        grid = (gn, gm)
        in_specs = [
            pl.BlockSpec((tm, tk), lambda j, i: (i, 0)),
            pl.BlockSpec((tk, tn), lambda j, i: (0, j)),
        ]
        out_spec = pl.BlockSpec((tm, tn), lambda j, i: (i, j))
        dim_sem = ("parallel", "parallel")
    else:
        if out_dtype == jnp.float32:
            kernel = functools.partial(_matmul_kernel_acc_in_out, k_rem=k_rem)
            scratch_shapes = []
        else:
            kernel = functools.partial(_matmul_kernel_scratch, k_rem=k_rem)
            scratch_shapes = [pltpu.VMEM((tm, tn), jnp.float32)]
        grid = (gn, gm, gk)
        in_specs = [
            pl.BlockSpec((tm, tk), lambda j, i, k: (i, k)),
            pl.BlockSpec((tk, tn), lambda j, i, k: (k, j)),
        ]
        out_spec = pl.BlockSpec((tm, tn), lambda j, i, k: (i, j))
        dim_sem = ("parallel", "parallel", "arbitrary")

    vmem_limit = int(min(vmem_budget, max(_needed(tm) + (8 << 20), 32 << 20)))

    # Actual HBM traffic: x is re-streamed once per N strip; the W strip is
    # re-streamed once per M block only when the K reduction is split.
    cost = pl.CostEstimate(
        flops=2 * M * N * K,
        transcendentals=0,
        bytes_accessed=int(
            gn * M * K * in_bytes
            + (gm if gk > 1 else 1) * K * N * in_bytes
            + M * N * out_bytes),
    )

    return pl.pallas_call(
        kernel,
        out_shape=jax.ShapeDtypeStruct((M, N), out_dtype),
        grid=grid,
        in_specs=in_specs,
        out_specs=out_spec,
        scratch_shapes=scratch_shapes,
        compiler_params=pltpu.CompilerParams(
            dimension_semantics=dim_sem,
            vmem_limit_bytes=vmem_limit,
        ),
        cost_estimate=cost,
    )(x, w)


class OneLayerDataPartitionModelPallas:
    """JAX/Pallas forward of OneLayerDataPartitionModel: y = x @ W."""

    def __init__(self, weights, **linear_kwargs):
        # weights: (in_features, out_features)
        # TODO(synk): the torch process `group` only drives the backward
        # gradient all-reduce in DataParallelLinearLayer; no forward collective.
        self.weights = weights
        self._kwargs = linear_kwargs

    def __call__(self, x):
        return data_parallel_linear(x, self.weights, **self._kwargs)


if __name__ == "__main__":
    key = jax.random.PRNGKey(0)
    k1, k2, k3, k4, k5, k6 = jax.random.split(key, 6)

    # --- Test 1: shipped shape (one data shard): batch=128, in=256, out=128 ---
    M, K, N = 128, 256, 128
    x = jax.random.normal(k1, (M, K), dtype=jnp.float32)
    w = jax.random.normal(k2, (K, N), dtype=jnp.float32) * 0.02
    model = OneLayerDataPartitionModelPallas(w, allow_xla_fallback=False)
    y = jax.block_until_ready(model(x))
    y_ref = jnp.dot(x, w, preferred_element_type=jnp.float32)
    assert y.shape == (M, N)
    assert jnp.allclose(y, y_ref, atol=1e-4, rtol=1e-4), "test1 mismatch"

    # --- Test 2: ragged M/N/K + split-K path (f32 accumulate-into-output) -----
    M, K, N = 200, 320, 192
    x = jax.random.normal(k3, (M, K), dtype=jnp.float32)
    w = jax.random.normal(k4, (K, N), dtype=jnp.float32) * 0.02
    y = jax.block_until_ready(
        data_parallel_linear(x, w, tm=64, tn=128, tk=128,
                             allow_xla_fallback=False))
    y_ref = jnp.dot(x, w, preferred_element_type=jnp.float32)
    assert y.shape == (M, N)
    assert jnp.allclose(y, y_ref, atol=1e-3, rtol=1e-3), "test2 mismatch"

    # --- Test 3: bf16 operands + split-K (f32 scratch accumulator path) -------
    M, K, N = 128, 384, 128
    xb = (jax.random.normal(k5, (M, K), dtype=jnp.float32)).astype(jnp.bfloat16)
    wb = (jax.random.normal(k6, (K, N), dtype=jnp.float32) * 0.02).astype(
        jnp.bfloat16)
    y = jax.block_until_ready(
        data_parallel_linear(xb, wb, tm=128, tn=128, tk=128,
                             allow_xla_fallback=False))
    y_ref = jnp.dot(xb.astype(jnp.float32), wb.astype(jnp.float32),
                    preferred_element_type=jnp.float32)
    assert y.dtype == jnp.bfloat16 and y.shape == (M, N)
    assert jnp.allclose(y.astype(jnp.float32), y_ref, atol=1e-2, rtol=2e-2), \
        "test3 mismatch"

    print("KERNEL_OK")
</pallas_src>

<mosaic_0001>
module attributes {stable_mosaic.version = 11 : i64} {
  func.func @_matmul_kernel_single_k(%arg0: i32, %arg1: i32, %arg2: memref<128x256xf32, #tpu.memory_space<vmem>>, %arg3: memref<256x128xf32, #tpu.memory_space<vmem>>, %arg4: memref<128x128xf32, #tpu.memory_space<vmem>>) attributes {dimension_semantics = [#tpu.dimension_semantics<parallel>, #tpu.dimension_semantics<parallel>], iteration_bounds = array<i64: 1, 1>, scalar_prefetch = 0 : i64, scratch_operands = 0 : i64, tpu.core_type = #tpu.core_type<tc>, window_params = [{transform_indices = @transform_0, window_bounds = array<i64: 128, 256>}, {transform_indices = @transform_1, window_bounds = array<i64: 256, 128>}, {transform_indices = @transform_2, window_bounds = array<i64: 128, 128>}]} {
    %c0 = arith.constant 0 : index
    %c0_0 = arith.constant 0 : index
    %0 = vector.load %arg2[%c0, %c0_0] : memref<128x256xf32, #tpu.memory_space<vmem>>, vector<128x256xf32>
    %c0_1 = arith.constant 0 : index
    %c0_2 = arith.constant 0 : index
    %1 = vector.load %arg3[%c0_1, %c0_2] : memref<256x128xf32, #tpu.memory_space<vmem>>, vector<256x128xf32>
    %cst = arith.constant dense<0.000000e+00> : vector<128x128xf32>
    %2 = tpu.matmul %0, %1, %cst {dimension_numbers = #tpu.dot_dimension_numbers<[1], [0], [0], [1], [0, 0, 1, 1], [], []>} : vector<128x256xf32>, vector<256x128xf32>, vector<128x128xf32> -> vector<128x128xf32>
    %c0_3 = arith.constant 0 : index
    %c0_4 = arith.constant 0 : index
    %3 = vector.load %arg4[%c0_3, %c0_4] : memref<128x128xf32, #tpu.memory_space<vmem>>, vector<128x128xf32>
    tpu.vector_store %arg4[%c0_3, %c0_4], %2 {strides = array<i32>} : memref<128x128xf32, #tpu.memory_space<vmem>>, vector<128x128xf32>,
    return
  }
  func.func @transform_0(%arg0: i32, %arg1: i32) -> (i32, i32) {
    %c0_i32 = arith.constant 0 : i32
    %c0_i32_0 = arith.constant 0 : i32
    return %arg1, %c0_i32 : i32, i32
  }
  func.func @transform_1(%arg0: i32, %arg1: i32) -> (i32, i32) {
    %c0_i32 = arith.constant 0 : i32
    %c0_i32_0 = arith.constant 0 : i32
    return %c0_i32, %arg0 : i32, i32
  }
  func.func @transform_2(%arg0: i32, %arg1: i32) -> (i32, i32) {
    %c0_i32 = arith.constant 0 : i32
    return %arg1, %arg0 : i32, i32
  }
}

</mosaic_0001>

<llo_original>
// kernel: tpu_custom_call.1
$region0: #{tpu_custom_call.1}
  #allocation0 [shape = 'u32[]', space=smem, size = 0x4, offset = 0x4, fixed_abs, tag = 'smem constant byte address 0x4 - core index']
  #allocation1 [shape = 'u32[144,128]{1,0:T(1,128)}', space=vmem, size = 0x12000, scoped, tag = 'internal scratch']
  %s0 = inlined_call_operand.hbm [shape: f32[128,256], index: 0, kind: input, shape index: {}]
  %s1 = inlined_call_operand.hbm [shape: f32[256,128], index: 1, kind: input, shape index: {}]
  %s2 = inlined_call_operand.hbm [shape: f32[128,128], index: 2, kind: output, shape index: {}]
  %s3 = sld [smem:[#allocation0]]
  $region26: #{tpu_custom_call.1} parent=0
    _
  %s5 = ssub.s32 1, %s3
  %s6 = scalar_select 0, %s5, %s3
  $region1: #{tpu_custom_call.1} parent=0
    #allocation2 [shape = 'u8[131072]{0}', space=vmem, size = 0x20000, scoped, tag = 'input window, operand 0, single buffered']
    #allocation3 [shape = 's32[1]{0}', space=sflag, size = 0x4, scoped, tag = 'scoped memory for tpu_custom_call.1']
    #allocation4 [shape = 's32[1]{0}', space=sflag, size = 0x4, scoped, tag = 'scoped memory for tpu_custom_call.1']
    #allocation5 [shape = 'u8[131072]{0}', space=vmem, size = 0x20000, scoped, tag = 'input window, operand 1, single buffered']
    #allocation6 [shape = 's32[1]{0}', space=sflag, size = 0x4, scoped, tag = 'scoped memory for tpu_custom_call.1']
    #allocation7 [shape = 'u8[65536]{0}', space=vmem, size = 0x10000, scoped, tag = 'output window, operand 0, single buffered']
    %7 = vsyncpa [#allocation3], 0
    %8 = vsyncpa [#allocation6], 0
    %9 = vsyncpa [#allocation4], 0
    // Predicated region
    $region2: #{tpu_custom_call.1} parent=1 // pred_check
      _
    $region3: #{tpu_custom_call.1} parent=1 // pred_check_branch
      %11 = sbr.rel (0) target = $region5
    $region4: #{tpu_custom_call.1} parent=1 // pred_region
      %s13 = ssub.s32 4096, 4096
      %14 = vsyncadd [#allocation3], %s13
      %s15 = sshll.u32 [#allocation2], 4
      %s16 = int_to_ptr.vmem [resolvable:$true] %s15
      %21 = dma.hbm_to_vmem [thread:$0]  %s0, 4096, %s16, [#allocation3], 256, 256, 16
    $region5: #{tpu_custom_call.1} parent=1 // pred_fallthru
      _
    // Predicated region
    $region6: #{tpu_custom_call.1} parent=1 // pred_check
      _
    $region7: #{tpu_custom_call.1} parent=1 // pred_check_branch
      %23 = sbr.rel (0) target = $region9
    $region8: #{tpu_custom_call.1} parent=1 // pred_region
      %s25 = ssub.s32 4096, 4096
      %26 = vsyncadd [#allocation6], %s25
      %s27 = sshll.u32 [#allocation5], 4
      %s28 = int_to_ptr.vmem [resolvable:$true] %s27
      %33 = dma.hbm_to_vmem [thread:$0]  %s1, 4096, %s28, [#allocation6], 128, 128, 8
    $region9: #{tpu_custom_call.1} parent=1 // pred_fallthru
      _
    // Predicated region
    $region10: #{tpu_custom_call.1} parent=1 // pred_check
      _
    $region11: #{tpu_custom_call.1} parent=1 // pred_check_branch
      %35 = sbr.rel (0) target = $region13
    $region12: #{tpu_custom_call.1} parent=1 // pred_region
      %36 = dma.done [#allocation3], 4096
    $region13: #{tpu_custom_call.1} parent=1 // pred_fallthru
      _
    // Predicated region
    $region14: #{tpu_custom_call.1} parent=1 // pred_check
      _
    $region15: #{tpu_custom_call.1} parent=1 // pred_check_branch
      %38 = sbr.rel (0) target = $region17
    $region16: #{tpu_custom_call.1} parent=1 // pred_region
      %39 = dma.done [#allocation6], 4096
    $region17: #{tpu_custom_call.1} parent=1 // pred_fallthru
      _
    %v40 = vld [vmem:[#allocation2] sm:$0xff]
    %v41 = vld [vmem:[#allocation2 + $0x8] sm:$0xff]
    %v42 = vld [vmem:[#allocation2 + $0x10] sm:$0xff]
    %v43 = vld [vmem:[#allocation2 + $0x18] sm:$0xff]
    %v44 = vld [vmem:[#allocation2 + $0x20] sm:$0xff]
    %v45 = vld [vmem:[#allocation2 + $0x28] sm:$0xff]
    %v46 = vld [vmem:[#allocation2 + $0x30] sm:$0xff]
    %v47 = vld [vmem:[#allocation2 + $0x38] sm:$0xff]
    %v48 = vld [vmem:[#allocation2 + $0x40] sm:$0xff]
    %v49 = vld [vmem:[#allocation2 + $0x48] sm:$0xff]
    %v50 = vld [vmem:[#allocation2 + $0x50] sm:$0xff]
    %v51 = vld [vmem:[#allocation2 + $0x58] sm:$0xff]
    %v52 = vld [vmem:[#allocation2 + $0x60] sm:$0xff]
    %v53 = vld [vmem:[#allocation2 + $0x68] sm:$0xff]
    %v54 = vld [vmem:[#allocation2 + $0x70] sm:$0xff]
    %v55 = vld [vmem:[#allocation2 + $0x78] sm:$0xff]
    %v56 = vld [vmem:[#allocation2 + $0x80] sm:$0xff]
    %v57 = vld [vmem:[#allocation2 + $0x88] sm:$0xff]
    %v58 = vld [vmem:[#allocation2 + $0x90] sm:$0xff]
    %v59 = vld [vmem:[#allocation2 + $0x98] sm:$0xff]
    %v60 = vld [vmem:[#allocation2 + $0xa0] sm:$0xff]
    %v61 = vld [vmem:[#allocation2 + $0xa8] sm:$0xff]
    %v62 = vld [vmem:[#allocation2 + $0xb0] sm:$0xff]
    %v63 = vld [vmem:[#allocation2 + $0xb8] sm:$0xff]
    %v64 = vld [vmem:[#allocation2 + $0xc0] sm:$0xff]
    %v65 = vld [vmem:[#allocation2 + $0xc8] sm:$0xff]
    %v66 = vld [vmem:[#allocation2 + $0xd0] sm:$0xff]
    %v67 = vld [vmem:[#allocation2 + $0xd8] sm:$0xff]
    %v68 = vld [vmem:[#allocation2 + $0xe0] sm:$0xff]
    %v69 = vld [vmem:[#allocation2 + $0xe8] sm:$0xff]
    %v70 = vld [vmem:[#allocation2 + $0xf0] sm:$0xff]
    %v71 = vld [vmem:[#allocation2 + $0xf8] sm:$0xff]
    %v72 = vld [vmem:[#allocation5] sm:$0xff]
    %v73 = vld [vmem:[#allocation5 + $0x8] sm:$0xff]
    %v74 = vld [vmem:[#allocation5 + $0x10] sm:$0xff]
    %v75 = vld [vmem:[#allocation5 + $0x18] sm:$0xff]
    %v76 = vld [vmem:[#allocation5 + $0x20] sm:$0xff]
    %v77 = vld [vmem:[#allocation5 + $0x28] sm:$0xff]
    %v78 = vld [vmem:[#allocation5 + $0x30] sm:$0xff]
    %v79 = vld [vmem:[#allocation5 + $0x38] sm:$0xff]
    %v80 = vld [vmem:[#allocation5 + $0x40] sm:$0xff]
    %v81 = vld [vmem:[#allocation5 + $0x48] sm:$0xff]
    %v82 = vld [vmem:[#allocation5 + $0x50] sm:$0xff]
    %v83 = vld [vmem:[#allocation5 + $0x58] sm:$0xff]
    %v84 = vld [vmem:[#allocation5 + $0x60] sm:$0xff]
    %v85 = vld [vmem:[#allocation5 + $0x68] sm:$0xff]
    %v86 = vld [vmem:[#allocation5 + $0x70] sm:$0xff]
    %v87 = vld [vmem:[#allocation5 + $0x78] sm:$0xff]
    %v88 = vld [vmem:[#allocation5 + $0x80] sm:$0xff]
    %v89 = vld [vmem:[#allocation5 + $0x88] sm:$0xff]
    %v90 = vld [vmem:[#allocation5 + $0x90] sm:$0xff]
    %v91 = vld [vmem:[#allocation5 + $0x98] sm:$0xff]
    %v92 = vld [vmem:[#allocation5 + $0xa0] sm:$0xff]
    %v93 = vld [vmem:[#allocation5 + $0xa8] sm:$0xff]
    %v94 = vld [vmem:[#allocation5 + $0xb0] sm:$0xff]
    %v95 = vld [vmem:[#allocation5 + $0xb8] sm:$0xff]
    %v96 = vld [vmem:[#allocation5 + $0xc0] sm:$0xff]
    %v97 = vld [vmem:[#allocation5 + $0xc8] sm:$0xff]
    %v98 = vld [vmem:[#allocation5 + $0xd0] sm:$0xff]
    %v99 = vld [vmem:[#allocation5 + $0xd8] sm:$0xff]
    %v100 = vld [vmem:[#allocation5 + $0xe0] sm:$0xff]
    %v101 = vld [vmem:[#allocation5 + $0xe8] sm:$0xff]
    %v102 = vld [vmem:[#allocation5 + $0xf0] sm:$0xff]
    %v103 = vld [vmem:[#allocation5 + $0xf8] sm:$0xff]
    %104 = vmatprep.subr.mxu0 0.0
    %105 = vmatpush1.msra.mxu0 %v87
    %106 = vmatprep.subr.mxu0 0.0
    %107 = vmatpush1.msra.mxu0 %v86
    %108 = vmatprep.subr.mxu0 0.0
    %109 = vmatpush1.msra.mxu0 %v85
    %110 = vmatprep.subr.mxu0 0.0
    %111 = vmatpush1.msra.mxu0 %v84
    %112 = vmatprep.subr.mxu0 0.0
    %113 = vmatpush1.msra.mxu0 %v83
    %114 = vmatprep.subr.mxu0 0.0
    %115 = vmatpush1.msra.mxu0 %v82
    %116 = vmatprep.subr.mxu0 0.0
    %117 = vmatpush1.msra.mxu0 %v81
    %118 = vmatprep.subr.mxu0 0.0
    %119 = vmatpush1.msra.mxu0 %v80
    %120 = vmatprep.subr.mxu0 0.0
    %121 = vmatpush1.msra.mxu0 %v79
    %122 = vmatprep.subr.mxu0 0.0
    %123 = vmatpush1.msra.mxu0 %v78
    %124 = vmatprep.subr.mxu0 0.0
    %125 = vmatpush1.msra.mxu0 %v77
    %126 = vmatprep.subr.mxu0 0.0
    %127 = vmatpush1.msra.mxu0 %v76
    %128 = vmatprep.subr.mxu0 0.0
    %129 = vmatpush1.msra.mxu0 %v75
    %130 = vmatprep.subr.mxu0 0.0
    %131 = vmatpush1.msra.mxu0 %v74
    %132 = vmatprep.subr.mxu0 0.0
    %133 = vmatpush1.msra.mxu0 %v73
    %134 = vmatprep.subr.mxu0 0.0
    %135 = vmatpush1.msra.mxu0 %v72
    %136 = vmatprep.subr.mxu0 0.0
    %137 = vmatpush2.msra.mxu0 %v103
    %138 = vmatprep.subr.mxu0 0.0
    %139 = vmatpush2.msra.mxu0 %v102
    %140 = vmatprep.subr.mxu0 0.0
    %141 = vmatpush2.msra.mxu0 %v101
    %142 = vmatprep.subr.mxu0 0.0
    %143 = vmatpush2.msra.mxu0 %v100
    %144 = vmatprep.subr.mxu0 0.0
    %145 = vmatpush2.msra.mxu0 %v99
    %146 = vmatprep.subr.mxu0 0.0
    %147 = vmatpush2.msra.mxu0 %v98
    %148 = vmatprep.subr.mxu0 0.0
    %149 = vmatpush2.msra.mxu0 %v97
    %150 = vmatprep.subr.mxu0 0.0
    %151 = vmatpush2.msra.mxu0 %v96
    %152 = vmatprep.subr.mxu0 0.0
    %153 = vmatpush2.msra.mxu0 %v95
    %154 = vmatprep.subr.mxu0 0.0
    %155 = vmatpush2.msra.mxu0 %v94
    %156 = vmatprep.subr.mxu0 0.0
    %157 = vmatpush2.msra.mxu0 %v93
    %158 = vmatprep.subr.mxu0 0.0
    %159 = vmatpush2.msra.mxu0 %v92
    %160 = vmatprep.subr.mxu0 0.0
    %161 = vmatpush2.msra.mxu0 %v91
    %162 = vmatprep.subr.mxu0 0.0
    %163 = vmatpush2.msra.mxu0 %v90
    %164 = vmatprep.subr.mxu0 0.0
    %165 = vmatpush2.msra.mxu0 %v89
    %166 = vmatprep.subr.mxu0 0.0
    %167 = vmatpush2.msra.mxu0 %v88
    %168 = vmatprep.mubr.f32.mxu0 %v41
    %169 = vmatmul.mubr.f32.gmra.mxu0 %v40
    %v170 = vpop.f32.mrf.mxu0
    %v171 = vadd.f32 0.0, %v170
    %v172 = vpop.f32.mrf.mxu0
    %173 = vmatprep.mubr.f32.mxu0 %v43
    %174 = vmatmul.mubr.f32.gmra.mxu0 %v42
    %v175 = vpop.f32.mrf.mxu0
    %v176 = vadd.f32 0.0, %v175
    %v177 = vpop.f32.mrf.mxu0
    %178 = vmatprep.mubr.f32.mxu0 %v45
    %179 = vmatmul.mubr.f32.gmra.mxu0 %v44
    %v180 = vpop.f32.mrf.mxu0
    %v181 = vadd.f32 0.0, %v180
    %v182 = vpop.f32.mrf.mxu0
    %183 = vmatprep.mubr.f32.mxu0 %v47
    %184 = vmatmul.mubr.f32.gmra.mxu0 %v46
    %v185 = vpop.f32.mrf.mxu0
    %v186 = vadd.f32 0.0, %v185
    %v187 = vpop.f32.mrf.mxu0
    %188 = vmatprep.mubr.f32.mxu0 %v49
    %189 = vmatmul.mubr.f32.gmra.mxu0 %v48
    %v190 = vpop.f32.mrf.mxu0
    %v191 = vadd.f32 0.0, %v190
    %v192 = vpop.f32.mrf.mxu0
    %193 = vmatprep.mubr.f32.mxu0 %v51
    %194 = vmatmul.mubr.f32.gmra.mxu0 %v50
    %v195 = vpop.f32.mrf.mxu0
    %v196 = vadd.f32 0.0, %v195
    %v197 = vpop.f32.mrf.mxu0
    %198 = vmatprep.mubr.f32.mxu0 %v53
    %199 = vmatmul.mubr.f32.gmra.mxu0 %v52
    %v200 = vpop.f32.mrf.mxu0
    %v201 = vadd.f32 0.0, %v200
    %v202 = vpop.f32.mrf.mxu0
    %203 = vmatprep.mubr.f32.mxu0 %v55
    %204 = vmatmul.mubr.f32.gmra.mxu0 %v54
    %v205 = vpop.f32.mrf.mxu0
    %v206 = vadd.f32 0.0, %v205
    %v207 = vpop.f32.mrf.mxu0
    %208 = vmatprep.mubr.f32.mxu0 %v57
    %209 = vmatmul.mubr.f32.gmra.mxu0 %v56
    %v210 = vpop.f32.mrf.mxu0
    %v211 = vadd.f32 0.0, %v210
    %v212 = vpop.f32.mrf.mxu0
    %213 = vmatprep.mubr.f32.mxu0 %v59
    %214 = vmatmul.mubr.f32.gmra.mxu0 %v58
    %v215 = vpop.f32.mrf.mxu0
    %v216 = vadd.f32 0.0, %v215
    %v217 = vpop.f32.mrf.mxu0
    %218 = vmatprep.mubr.f32.mxu0 %v61
    %219 = vmatmul.mubr.f32.gmra.mxu0 %v60
    %v220 = vpop.f32.mrf.mxu0
    %v221 = vadd.f32 0.0, %v220
    %v222 = vpop.f32.mrf.mxu0
    %223 = vmatprep.mubr.f32.mxu0 %v63
    %224 = vmatmul.mubr.f32.gmra.mxu0 %v62
    %v225 = vpop.f32.mrf.mxu0
    %v226 = vadd.f32 0.0, %v225
    %v227 = vpop.f32.mrf.mxu0
    %228 = vmatprep.mubr.f32.mxu0 %v65
    %229 = vmatmul.mubr.f32.gmra.mxu0 %v64
    %v230 = vpop.f32.mrf.mxu0
    %v231 = vadd.f32 0.0, %v230
    %v232 = vpop.f32.mrf.mxu0
    %233 = vmatprep.mubr.f32.mxu0 %v67
    %234 = vmatmul.mubr.f32.gmra.mxu0 %v66
    %v235 = vpop.f32.mrf.mxu0
    %v236 = vadd.f32 0.0, %v235
    %v237 = vpop.f32.mrf.mxu0
    %238 = vmatprep.mubr.f32.mxu0 %v69
    %239 = vmatmul.mubr.f32.gmra.mxu0 %v68
    %v240 = vpop.f32.mrf.mxu0
    %v241 = vadd.f32 0.0, %v240
    %v242 = vpop.f32.mrf.mxu0
    %243 = vmatprep.mubr.f32.mxu0 %v71
    %244 = vmatmul.mubr.f32.gmra.mxu0 %v70
    %v245 = vpop.f32.mrf.mxu0
    %v246 = vadd.f32 0.0, %v245
    %v247 = vpop.f32.mrf.mxu0
    %248 = vdwg.mxu0
    %249 = vst [vmem:[#allocation7] sm:$0xff] %v171
    %250 = vst [vmem:[#allocation7 + $0x8] sm:$0xff] %v176
    %251 = vst [vmem:[#allocation7 + $0x10] sm:$0xff] %v181
    %252 = vst [vmem:[#allocation7 + $0x18] sm:$0xff] %v186
    %253 = vst [vmem:[#allocation7 + $0x20] sm:$0xff] %v191
    %254 = vst [vmem:[#allocation7 + $0x28] sm:$0xff] %v196
    %255 = vst [vmem:[#allocation7 + $0x30] sm:$0xff] %v201
    %256 = vst [vmem:[#allocation7 + $0x38] sm:$0xff] %v206
    %257 = vst [vmem:[#allocation7 + $0x40] sm:$0xff] %v211
    %258 = vst [vmem:[#allocation7 + $0x48] sm:$0xff] %v216
    %259 = vst [vmem:[#allocation7 + $0x50] sm:$0xff] %v221
    %260 = vst [vmem:[#allocation7 + $0x58] sm:$0xff] %v226
    %261 = vst [vmem:[#allocation7 + $0x60] sm:$0xff] %v231
    %262 = vst [vmem:[#allocation7 + $0x68] sm:$0xff] %v236
    %263 = vst [vmem:[#allocation7 + $0x70] sm:$0xff] %v241
    %264 = vst [vmem:[#allocation7 + $0x78] sm:$0xff] %v246
    // Predicated region
    $region18: #{tpu_custom_call.1} parent=1 // pred_check
      _
    $region19: #{tpu_custom_call.1} parent=1 // pred_check_branch
      %266 = sbr.rel (0) target = $region21
    $region20: #{tpu_custom_call.1} parent=1 // pred_region
      %s268 = ssub.s32 2048, 2048
      %269 = vsyncadd [#allocation4], %s268
      %s270 = sshll.u32 [#allocation7], 4
      %s271 = int_to_ptr.vmem [resolvable:$true] %s270
      %276 = dma.vmem_to_hbm [thread:$0]  %s271, 2048, %s2, [#allocation4], 128, 128, 8
    $region21: #{tpu_custom_call.1} parent=1 // pred_fallthru
      _
    // Predicated region
    $region22: #{tpu_custom_call.1} parent=1 // pred_check
      _
    $region23: #{tpu_custom_call.1} parent=1 // pred_check_branch
      %278 = sbr.rel (0) target = $region25
    $region24: #{tpu_custom_call.1} parent=1 // pred_region
      %279 = dma.done [#allocation4], 2048
    $region25: #{tpu_custom_call.1} parent=1 // pred_fallthru
      _
    %280 = vsyncpa [#allocation3], 1
    %281 = vsyncpa [#allocation6], 1
    %282 = vsyncpa [#allocation4], 1

</llo_original>
